<compile_context>
chip_gen: v5e
topology: v5e:2x2
jax: 0.10.0
libtpu: 0.0.40
codegen_flags: <defaults>
</compile_context>

<pallas_src>
import jax
import jax.numpy as jnp
from jax.experimental import pallas as pl
from jax.experimental.pallas import tpu as pltpu

NEG_BIG = -1e30  # bias for padded (non-existent) classes -> exp() == 0


def mlp_kernel(x_ref, w1_ref, b1_ref, w2_ref, b2_ref, out_ref):
    # In-kernel f32 -> bf16 cast of the activation tile (VPU, hides under DMA).
    x = x_ref[...].astype(jnp.bfloat16)

    # Hidden layer: bf16 MXU matmul, f32 accumulation, bias + ReLU in f32
    # (v5e VPU/EUP has no bf16, so elementwise math stays f32 everywhere).
    h = jnp.dot(x, w1_ref[...], preferred_element_type=jnp.float32)
    h = jnp.maximum(h + b1_ref[...], 0.0)

    # Output layer: bf16 MXU matmul, f32 accumulation.
    logits = jnp.dot(h.astype(jnp.bfloat16), w2_ref[...],
                     preferred_element_type=jnp.float32) + b2_ref[...]

    # Numerically stable softmax over the (padded-to-128) class axis.  Padded
    # classes carry a -1e30 bias, so exp(logit - m) == 0 and they contribute
    # nothing to the denominator -> identical to softmax over the real classes.
    m = jnp.max(logits, axis=-1, keepdims=True)
    e = jnp.exp(logits - m)
    denom = jnp.sum(e, axis=-1, keepdims=True)
    # Exact normalization (kernel is not EUP-bound; approx reciprocal buys nothing).
    out_ref[...] = (e / denom).astype(out_ref.dtype)


def _round_up(n, m):
    return ((n + m - 1) // m) * m


def _pick_tm(batch, cap=1024):
    """Batch tile: multiple of 16 (bf16 sublane packing), aims for >= 2 grid
    programs (megacore split on v7x) and caps at 1024 rows (HBM-roofline sweet
    spot, ~1-2 MiB VMEM total)."""
    return max(16, min(cap, _round_up(-(-batch // 2), 16)))


def prepare_params(w1_t, b1, w2_t, b2):
    """One-time (init-path) padding + casting of the Linear parameters.
    w1_t: (input_size, hidden); b1: (1, hidden);
    w2_t: (hidden, output_size); b2: (1, output_size)."""
    hidden = w1_t.shape[1]
    out_size = w2_t.shape[1]
    hp = _round_up(hidden, 128)        # lane-dense hidden dim
    op = _round_up(out_size, 128)      # lane-dense class dim

    # Hidden padding: zero W1 columns / b1 entries / W2 rows (mathematical identity).
    w1_p = jnp.pad(w1_t, ((0, 0), (0, hp - hidden))).astype(jnp.bfloat16)
    b1_p = jnp.pad(b1, ((0, 0), (0, hp - hidden))).astype(jnp.float32)
    w2_p = jnp.pad(w2_t, ((0, hp - hidden), (0, op - out_size))).astype(jnp.bfloat16)
    # Class padding: padded classes get a huge negative f32 bias -> softmax weight 0.
    b2_p = jnp.pad(b2, ((0, 0), (0, op - out_size)),
                   constant_values=NEG_BIG).astype(jnp.float32)
    return {"w1": w1_p, "b1": b1_p, "w2": w2_p, "b2": b2_p, "out_size": out_size}


def neural_net_forward(x, params, *, tm=None):
    """x: (B, input_size) f32; params: output of prepare_params().
    Returns (B, output_size) f32 softmax probabilities."""
    B, in_size = x.shape
    w1, b1, w2, b2 = params["w1"], params["b1"], params["w2"], params["b2"]
    hp = w1.shape[1]
    op = w2.shape[1]
    out_size = params["out_size"]

    if tm is None:
        tm = _pick_tm(B)
    grid = (pl.cdiv(B, tm),)   # edge tile (if any) is masked by Pallas

    out = pl.pallas_call(
        mlp_kernel,
        out_shape=jax.ShapeDtypeStruct((B, op), jnp.bfloat16),  # bf16 writeback
        grid_spec=pltpu.PrefetchScalarGridSpec(
            num_scalar_prefetch=0,
            grid=grid,
            in_specs=[
                pl.BlockSpec((tm, in_size), lambda i: (i, 0)),   # x tile (pipelined)
                pl.BlockSpec((in_size, hp), lambda i: (0, 0)),   # W1 (VMEM-resident)
                pl.BlockSpec((1, hp), lambda i: (0, 0)),         # b1 (resident)
                pl.BlockSpec((hp, op), lambda i: (0, 0)),        # W2 (resident)
                pl.BlockSpec((1, op), lambda i: (0, 0)),         # b2 (resident)
            ],
            out_specs=pl.BlockSpec((tm, op), lambda i: (i, 0)),  # lane-dense slab
        ),
        compiler_params=pltpu.CompilerParams(
            dimension_semantics=("parallel",)),   # megacore split on v7x
    )(x, w1, b1, w2, b2)

    # Tiny (B, out_size) slice + cast back to f32 in the wrapper.
    return out[:, :out_size].astype(jnp.float32)


def reference_forward_bf16(x, w1_t, b1, w2_t, b2):
    """Mirrors the kernel's dtype choices (bf16 MXU operands, f32 accum/softmax)."""
    xb = x.astype(jnp.bfloat16)
    w1b = w1_t.astype(jnp.bfloat16)
    w2b = w2_t.astype(jnp.bfloat16)
    h = jnp.maximum(
        jnp.dot(xb, w1b, preferred_element_type=jnp.float32) + b1, 0.0)
    logits = jnp.dot(h.astype(jnp.bfloat16), w2b,
                     preferred_element_type=jnp.float32) + b2
    return jax.nn.softmax(logits, axis=1)


def reference_forward_f32(x, w1_t, b1, w2_t, b2):
    h = jnp.maximum(x @ w1_t + b1, 0.0)
    logits = h @ w2_t + b2
    return jax.nn.softmax(logits, axis=1)


def _check(batch, input_size, hidden, output_size, key):
    kx, kw1, kb1, kw2, kb2 = jax.random.split(key, 5)
    x = jax.random.normal(kx, (batch, input_size), dtype=jnp.float32)
    # PyTorch Linear stores (out, in); we keep the transposed (in, out) layout.
    w1_t = jax.random.normal(kw1, (input_size, hidden), dtype=jnp.float32) * 0.1
    b1 = jax.random.normal(kb1, (1, hidden), dtype=jnp.float32) * 0.01
    w2_t = jax.random.normal(kw2, (hidden, output_size), dtype=jnp.float32) * 0.1
    b2 = jax.random.normal(kb2, (1, output_size), dtype=jnp.float32) * 0.01

    params = prepare_params(w1_t, b1, w2_t, b2)   # once, outside the hot path
    out = neural_net_forward(x, params)
    out = jax.block_until_ready(out)
    assert out.shape == (batch, output_size)

    # Check against a reference with matching dtype behavior (bf16 MXU operands,
    # f32 softmax); tolerance absorbs the final bf16 output quantization.
    ref_bf16 = reference_forward_bf16(x, w1_t, b1, w2_t, b2)
    assert jnp.allclose(out, ref_bf16, atol=1.5e-2, rtol=1.5e-2)

    # Semantic sanity check against full-f32 module math (looser: bf16 casts).
    ref_f32 = reference_forward_f32(x, w1_t, b1, w2_t, b2)
    assert jnp.allclose(out, ref_f32, atol=5e-2, rtol=5e-2)

    # Softmax rows sum to ~1 (bf16 output quantization -> small deviation).
    assert jnp.allclose(jnp.sum(out, axis=1), 1.0, atol=1.5e-2)


if __name__ == "__main__":
    # Module-consistent small shapes: NeuralNet(input_size=16, output_size=8,
    # hidden_layers=[64]); batch = 4.
    input_size, hidden, output_size = 16, 64, 8
    key = jax.random.PRNGKey(0)
    k0, k1, k2 = jax.random.split(key, 3)

    # TODO(synk): nn.Dropout (only instantiated for >1 hidden layer) is
    # inference-time identity and therefore omitted; training-mode dropout is
    # not implemented.

    _check(4, input_size, hidden, output_size, k0)    # single tiny tile (tm=16)
    _check(64, input_size, hidden, output_size, k1)   # 2 programs, exact tiling
    _check(37, input_size, hidden, output_size, k2)   # 2 programs + masked edge tile

    print("KERNEL_OK")
</pallas_src>

<mosaic_0001>
module attributes {stable_mosaic.version = 11 : i64} {
  func.func @mlp_kernel(%arg0: i32, %arg1: memref<16x16xf32, #tpu.memory_space<vmem>>, %arg2: memref<16x128xbf16, #tpu.memory_space<vmem>>, %arg3: memref<1x128xf32, #tpu.memory_space<vmem>>, %arg4: memref<128x128xbf16, #tpu.memory_space<vmem>>, %arg5: memref<1x128xf32, #tpu.memory_space<vmem>>, %arg6: memref<16x128xbf16, #tpu.memory_space<vmem>>) attributes {dimension_semantics = [#tpu.dimension_semantics<parallel>], iteration_bounds = array<i64: 1>, scalar_prefetch = 0 : i64, scratch_operands = 0 : i64, tpu.core_type = #tpu.core_type<tc>, window_params = [{transform_indices = @transform_0, window_bounds = array<i64: 16, 16>}, {pipeline_mode = #tpu.pipeline_mode<synchronous>, transform_indices = @transform_1, window_bounds = array<i64: 16, 128>}, {pipeline_mode = #tpu.pipeline_mode<synchronous>, transform_indices = @transform_2, window_bounds = array<i64: 1, 128>}, {pipeline_mode = #tpu.pipeline_mode<synchronous>, transform_indices = @transform_3, window_bounds = array<i64: 128, 128>}, {pipeline_mode = #tpu.pipeline_mode<synchronous>, transform_indices = @transform_4, window_bounds = array<i64: 1, 128>}, {transform_indices = @transform_5, window_bounds = array<i64: 16, 128>}]} {
    %c0 = arith.constant 0 : index
    %c0_0 = arith.constant 0 : index
    %0 = vector.load %arg1[%c0, %c0_0] : memref<16x16xf32, #tpu.memory_space<vmem>>, vector<16x16xf32>
    %1 = arith.truncf %0 : vector<16x16xf32> to vector<16x16xbf16>
    %c0_1 = arith.constant 0 : index
    %c0_2 = arith.constant 0 : index
    %2 = vector.load %arg2[%c0_1, %c0_2] : memref<16x128xbf16, #tpu.memory_space<vmem>>, vector<16x128xbf16>
    %cst = arith.constant dense<0.000000e+00> : vector<16x128xf32>
    %3 = tpu.matmul %1, %2, %cst {dimension_numbers = #tpu.dot_dimension_numbers<[1], [0], [0], [1], [0, 0, 1, 1], [], []>} : vector<16x16xbf16>, vector<16x128xbf16>, vector<16x128xf32> -> vector<16x128xf32>
    %c0_3 = arith.constant 0 : index
    %c0_4 = arith.constant 0 : index
    %4 = vector.load %arg3[%c0_3, %c0_4] : memref<1x128xf32, #tpu.memory_space<vmem>>, vector<1x128xf32>
    %5 = vector.broadcast %4 : vector<1x128xf32> to vector<16x128xf32>
    %6 = arith.addf %3, %5 : vector<16x128xf32>
    %cst_5 = arith.constant 0.000000e+00 : f32
    %7 = vector.broadcast %cst_5 : f32 to vector<16x128xf32>
    %8 = arith.maximumf %6, %7 : vector<16x128xf32>
    %9 = arith.truncf %8 : vector<16x128xf32> to vector<16x128xbf16>
    %c0_6 = arith.constant 0 : index
    %c0_7 = arith.constant 0 : index
    %10 = vector.load %arg4[%c0_6, %c0_7] : memref<128x128xbf16, #tpu.memory_space<vmem>>, vector<128x128xbf16>
    %cst_8 = arith.constant dense<0.000000e+00> : vector<16x128xf32>
    %11 = tpu.matmul %9, %10, %cst_8 {dimension_numbers = #tpu.dot_dimension_numbers<[1], [0], [0], [1], [0, 0, 1, 1], [], []>} : vector<16x128xbf16>, vector<128x128xbf16>, vector<16x128xf32> -> vector<16x128xf32>
    %c0_9 = arith.constant 0 : index
    %c0_10 = arith.constant 0 : index
    %12 = vector.load %arg5[%c0_9, %c0_10] : memref<1x128xf32, #tpu.memory_space<vmem>>, vector<1x128xf32>
    %13 = vector.broadcast %12 : vector<1x128xf32> to vector<16x128xf32>
    %14 = arith.addf %11, %13 : vector<16x128xf32>
    %cst_11 = arith.constant dense<0xFF800000> : vector<16xf32>
    %15 = vector.multi_reduction <maximumf>, %14, %cst_11 [1] : vector<16x128xf32> to vector<16xf32>
    %16 = vector.shape_cast %15 : vector<16xf32> to vector<16x1xf32>
    %17 = vector.broadcast %16 : vector<16x1xf32> to vector<16x128xf32>
    %18 = arith.subf %14, %17 : vector<16x128xf32>
    %19 = math.exp %18 : vector<16x128xf32>
    %cst_12 = arith.constant dense<0.000000e+00> : vector<16xf32>
    %20 = vector.multi_reduction <add>, %19, %cst_12 [1] : vector<16x128xf32> to vector<16xf32>
    %21 = vector.shape_cast %20 : vector<16xf32> to vector<16x1xf32>
    %22 = vector.broadcast %21 : vector<16x1xf32> to vector<16x128xf32>
    %23 = arith.divf %19, %22 : vector<16x128xf32>
    %24 = arith.truncf %23 : vector<16x128xf32> to vector<16x128xbf16>
    %c0_13 = arith.constant 0 : index
    %c0_14 = arith.constant 0 : index
    %25 = vector.load %arg6[%c0_13, %c0_14] : memref<16x128xbf16, #tpu.memory_space<vmem>>, vector<16x128xbf16>
    tpu.vector_store %arg6[%c0_13, %c0_14], %24 {strides = array<i32>} : memref<16x128xbf16, #tpu.memory_space<vmem>>, vector<16x128xbf16>,
    return
  }
  func.func @transform_0(%arg0: i32) -> (i32, i32) {
    %c0_i32 = arith.constant 0 : i32
    %c0_i32_0 = arith.constant 0 : i32
    return %arg0, %c0_i32 : i32, i32
  }
  func.func @transform_1(%arg0: i32) -> (i32, i32) {
    %c0_i32 = arith.constant 0 : i32
    %c0_i32_0 = arith.constant 0 : i32
    %c0_i32_1 = arith.constant 0 : i32
    return %c0_i32, %c0_i32_0 : i32, i32
  }
  func.func @transform_2(%arg0: i32) -> (i32, i32) {
    %c0_i32 = arith.constant 0 : i32
    %c0_i32_0 = arith.constant 0 : i32
    %c0_i32_1 = arith.constant 0 : i32
    return %c0_i32, %c0_i32_0 : i32, i32
  }
  func.func @transform_3(%arg0: i32) -> (i32, i32) {
    %c0_i32 = arith.constant 0 : i32
    %c0_i32_0 = arith.constant 0 : i32
    %c0_i32_1 = arith.constant 0 : i32
    return %c0_i32, %c0_i32_0 : i32, i32
  }
  func.func @transform_4(%arg0: i32) -> (i32, i32) {
    %c0_i32 = arith.constant 0 : i32
    %c0_i32_0 = arith.constant 0 : i32
    %c0_i32_1 = arith.constant 0 : i32
    return %c0_i32, %c0_i32_0 : i32, i32
  }
  func.func @transform_5(%arg0: i32) -> (i32, i32) {
    %c0_i32 = arith.constant 0 : i32
    %c0_i32_0 = arith.constant 0 : i32
    return %arg0, %c0_i32 : i32, i32
  }
}

</mosaic_0001>

<llo_original>
// kernel: tpu_custom_call.1
$region0: #{tpu_custom_call.1}
  #allocation0 [shape = 'u32[]', space=smem, size = 0x4, offset = 0x4, fixed_abs, tag = 'smem constant byte address 0x4 - core index']
  #allocation1 [shape = 'u32[72,128]{1,0:T(1,128)}', space=vmem, size = 0x9000, scoped, tag = 'internal scratch']
  %s0 = inlined_call_operand.hbm [shape: f32[4,16], index: 0, kind: input, shape index: {}]
  %s1 = inlined_call_operand.hbm [shape: bf16[16,128], index: 1, kind: input, shape index: {}]
  %s2 = inlined_call_operand.vmem [shape: f32[1,128], index: 2, kind: input, shape index: {}]
  %s3 = inlined_call_operand.hbm [shape: bf16[128,128], index: 3, kind: input, shape index: {}]
  %s4 = inlined_call_operand.vmem [shape: f32[1,128], index: 4, kind: input, shape index: {}]
  %s5 = inlined_call_operand.hbm [shape: bf16[4,128], index: 5, kind: output, shape index: {}]
  %s6 = sld [smem:[#allocation0]]
  $region42: #{tpu_custom_call.1} parent=0
    _
  %s8 = ssub.s32 1, %s6
  %s9 = scalar_select 0, %s8, %s6
  $region1: #{tpu_custom_call.1} parent=0
    #allocation2 [shape = 'u8[8192]{0}', space=vmem, size = 0x2000, scoped, tag = 'input window, operand 0, single buffered']
    #allocation3 [shape = 's32[1]{0}', space=sflag, size = 0x4, scoped, tag = 'scoped memory for tpu_custom_call.1']
    #allocation4 [shape = 's32[1]{0}', space=sflag, size = 0x4, scoped, tag = 'scoped memory for tpu_custom_call.1']
    #allocation5 [shape = 'u8[4096]{0}', space=vmem, size = 0x1000, scoped, tag = 'input window, operand 1, single buffered']
    #allocation6 [shape = 's32[1]{0}', space=sflag, size = 0x4, scoped, tag = 'scoped memory for tpu_custom_call.1']
    #allocation7 [shape = 'u8[32768]{0}', space=vmem, size = 0x8000, scoped, tag = 'input window, operand 3, single buffered']
    #allocation8 [shape = 'u8[4096]{0}', space=vmem, size = 0x1000, scoped, tag = 'output window, operand 0, single buffered']
    %10 = vsyncpa [#allocation3], 0
    %11 = vsyncpa [#allocation6], 0
    %12 = vsyncpa [#allocation4], 0
    // Predicated region
    $region2: #{tpu_custom_call.1} parent=1 // pred_check
      _
    $region3: #{tpu_custom_call.1} parent=1 // pred_check_branch
      %14 = sbr.rel (0) target = $region5
    $region4: #{tpu_custom_call.1} parent=1 // pred_region
      %16 = vsyncadd [#allocation3], 192
      %s17 = sshll.u32 %s0, 4
      %s18 = int_to_ptr.hbm [resolvable:$true] %s17
      %s19 = sshll.u32 [#allocation2], 4
      %s20 = int_to_ptr.vmem [resolvable:$true] %s19
      %25 = dma.hbm_to_vmem [thread:$0]  %s18, 64, %s20, [#allocation3], 64, 64, 4
    $region5: #{tpu_custom_call.1} parent=1 // pred_fallthru
      _
    // Predicated region
    $region6: #{tpu_custom_call.1} parent=1 // pred_check
      _
    $region7: #{tpu_custom_call.1} parent=1 // pred_check_branch
      %27 = sbr.rel (0) target = $region9
    $region8: #{tpu_custom_call.1} parent=1 // pred_region
      %29 = vsyncadd [#allocation6], 0
      %s30 = sshll.u32 %s1, 4
      %s31 = int_to_ptr.hbm [resolvable:$true] %s30
      %s32 = sshll.u32 [#allocation5], 4
      %s33 = int_to_ptr.vmem [resolvable:$true] %s32
      %38 = dma.hbm_to_vmem [thread:$0]  %s31, 128, %s33, [#allocation6], 64, 64, 4
    $region9: #{tpu_custom_call.1} parent=1 // pred_fallthru
      _
    // Predicated region
    $region10: #{tpu_custom_call.1} parent=1 // pred_check
      _
    $region11: #{tpu_custom_call.1} parent=1 // pred_check_branch
      %40 = sbr.rel (0) target = $region13
    $region12: #{tpu_custom_call.1} parent=1 // pred_region
      _
    $region13: #{tpu_custom_call.1} parent=1 // pred_fallthru
      _
    // Predicated region
    $region14: #{tpu_custom_call.1} parent=1 // pred_check
      _
    $region15: #{tpu_custom_call.1} parent=1 // pred_check_branch
      %42 = sbr.rel (0) target = $region17
    $region16: #{tpu_custom_call.1} parent=1 // pred_region
      %44 = vsyncadd [#allocation6], 0
      %s45 = sshll.u32 %s3, 4
      %s46 = int_to_ptr.hbm [resolvable:$true] %s45
      %s47 = sshll.u32 [#allocation7], 4
      %s48 = int_to_ptr.vmem [resolvable:$true] %s47
      %53 = dma.hbm_to_vmem [thread:$0]  %s46, 1024, %s48, [#allocation6], 64, 64, 4
    $region17: #{tpu_custom_call.1} parent=1 // pred_fallthru
      _
    // Predicated region
    $region18: #{tpu_custom_call.1} parent=1 // pred_check
      _
    $region19: #{tpu_custom_call.1} parent=1 // pred_check_branch
      %55 = sbr.rel (0) target = $region21
    $region20: #{tpu_custom_call.1} parent=1 // pred_region
      _
    $region21: #{tpu_custom_call.1} parent=1 // pred_fallthru
      _
    // Predicated region
    $region22: #{tpu_custom_call.1} parent=1 // pred_check
      _
    $region23: #{tpu_custom_call.1} parent=1 // pred_check_branch
      %57 = sbr.rel (0) target = $region25
    $region24: #{tpu_custom_call.1} parent=1 // pred_region
      %59 = dma.done [#allocation3], 256
    $region25: #{tpu_custom_call.1} parent=1 // pred_fallthru
      _
    // Predicated region
    $region26: #{tpu_custom_call.1} parent=1 // pred_check
      _
    $region27: #{tpu_custom_call.1} parent=1 // pred_check_branch
      %61 = sbr.rel (0) target = $region29
    $region28: #{tpu_custom_call.1} parent=1 // pred_region
      %63 = dma.done [#allocation6], 128
    $region29: #{tpu_custom_call.1} parent=1 // pred_fallthru
      _
    // Predicated region
    $region30: #{tpu_custom_call.1} parent=1 // pred_check
      _
    $region31: #{tpu_custom_call.1} parent=1 // pred_check_branch
      %65 = sbr.rel (0) target = $region33
    $region32: #{tpu_custom_call.1} parent=1 // pred_region
      %67 = dma.done [#allocation6], 1024
    $region33: #{tpu_custom_call.1} parent=1 // pred_fallthru
      _
    %v69 = vld [vmem:[#allocation2] sm:$0xff]
    %v70 = vld [vmem:[#allocation2 + $0x8] sm:$0xff]
    %v71 = vpack.c.bf16 %v70, %v69
    %v72 = vld [vmem:[#allocation5] sm:$0xf]
    %v73 = vld [vmem:[#allocation5 + $0x4] sm:$0xf]
    %v74 = vld [vmem:[%s2] sm:$0x1]
    %v76 = vperm.slane %v74, 0
    %v80 = vunpack.c.l.b16 %v72
    %v81 = vunpack.c.l.b16 %v73
    %v82 = vpack.c.b16 %v81, %v80
    %vm84 = vcmask 130048
    %v86 = vsel %vm84, %v71, 0
    %88 = vmatpush.bf16.msra.mxu0 0
    %89 = vmatpush.bf16.msra.mxu0 0
    %90 = vmatpush.bf16.msra.mxu0 0
    %91 = vmatpush.bf16.msra.mxu0 0
    %92 = vmatpush.bf16.msra.mxu0 0
    %93 = vmatpush.bf16.msra.mxu0 0
    %94 = vmatpush.bf16.msra.mxu0 0
    %95 = vmatpush.bf16.msra.mxu0 %v82
    %96 = vmatmul.bf16.gmra.mxu0 %v86
    %v97 = vpop.f32.mrf.mxu0
    %v98 = vadd.f32 %v76, %v97
    %v99 = vpop.f32.mrf.mxu0
    %v100 = vadd.f32 %v76, %v99
    %101 = vdwg.mxu0
    %v102 = vmax.f32 %v98, 0.0
    %v103 = vmax.f32 %v100, 0.0
    %v104 = vpack.c.bf16 %v103, %v102
    %v105 = vld [vmem:[#allocation7] sm:$0xf]
    %v106 = vld [vmem:[#allocation7 + $0x4] sm:$0xf]
    %v107 = vld [vmem:[#allocation7 + $0x8] sm:$0xf]
    %v108 = vld [vmem:[#allocation7 + $0xc] sm:$0xf]
    %v109 = vld [vmem:[#allocation7 + $0x10] sm:$0xf]
    %v110 = vld [vmem:[#allocation7 + $0x14] sm:$0xf]
    %v111 = vld [vmem:[#allocation7 + $0x18] sm:$0xf]
    %v112 = vld [vmem:[#allocation7 + $0x1c] sm:$0xf]
    %v113 = vld [vmem:[#allocation7 + $0x20] sm:$0xf]
    %v114 = vld [vmem:[#allocation7 + $0x24] sm:$0xf]
    %v115 = vld [vmem:[#allocation7 + $0x28] sm:$0xf]
    %v116 = vld [vmem:[#allocation7 + $0x2c] sm:$0xf]
    %v117 = vld [vmem:[#allocation7 + $0x30] sm:$0xf]
    %v118 = vld [vmem:[#allocation7 + $0x34] sm:$0xf]
    %v119 = vld [vmem:[#allocation7 + $0x38] sm:$0xf]
    %v120 = vld [vmem:[#allocation7 + $0x3c] sm:$0xf]
    %v121 = vld [vmem:[%s4] sm:$0x1]
    %v123 = vperm.slane %v121, 0
    %v141 = vunpack.c.l.b16 %v105
    %v142 = vunpack.c.l.b16 %v106
    %v143 = vunpack.c.l.b16 %v107
    %v144 = vunpack.c.l.b16 %v108
    %v145 = vunpack.c.l.b16 %v109
    %v146 = vunpack.c.l.b16 %v110
    %v147 = vunpack.c.l.b16 %v111
    %v148 = vunpack.c.l.b16 %v112
    %v149 = vunpack.c.l.b16 %v113
    %v150 = vunpack.c.l.b16 %v114
    %v151 = vunpack.c.l.b16 %v115
    %v152 = vunpack.c.l.b16 %v116
    %v153 = vunpack.c.l.b16 %v117
    %v154 = vunpack.c.l.b16 %v118
    %v155 = vunpack.c.l.b16 %v119
    %v156 = vunpack.c.l.b16 %v120
    %v157 = vpack.c.b16 %v142, %v141
    %v158 = vpack.c.b16 %v144, %v143
    %v159 = vpack.c.b16 %v146, %v145
    %v160 = vpack.c.b16 %v148, %v147
    %v161 = vpack.c.b16 %v150, %v149
    %v162 = vpack.c.b16 %v152, %v151
    %v163 = vpack.c.b16 %v154, %v153
    %v164 = vpack.c.b16 %v156, %v155
    %173 = vmatpush.bf16.msra.mxu0 %v164
    %174 = vmatpush.bf16.msra.mxu0 %v163
    %175 = vmatpush.bf16.msra.mxu0 %v162
    %176 = vmatpush.bf16.msra.mxu0 %v161
    %177 = vmatpush.bf16.msra.mxu0 %v160
    %178 = vmatpush.bf16.msra.mxu0 %v159
    %179 = vmatpush.bf16.msra.mxu0 %v158
    %180 = vmatpush.bf16.msra.mxu0 %v157
    %181 = vmatmul.bf16.gmra.mxu0 %v104
    %v182 = vpop.f32.mrf.mxu0
    %v183 = vadd.f32 %v123, %v182
    %v184 = vpop.f32.mrf.mxu0
    %v185 = vadd.f32 %v123, %v184
    %186 = vdwg.mxu0
    %187 = vmax.xlane.f32.xlu0 %v183
    %v188 = vpop.xlane.xlu0 %187
    %189 = vmax.xlane.f32.xlu0 %v185
    %v190 = vpop.xlane.xlu0 %189
    %v191 = vsub.f32 %v183, %v188
    %v192 = vsub.f32 %v185, %v190
    %v193 = vmul.f32 %v191, 1.442695
    %v194 = vpow.pop %v193
    %v195 = vmul.f32 %v192, 1.442695
    %v196 = vpow.pop %v195
    %197 = vadd.xlane.f32.xlu0 %v194
    %v198 = vpop.xlane.xlu0 %197
    %199 = vadd.xlane.f32.xlu0 %v196
    %v200 = vpop.xlane.xlu0 %199
    %v201 = vrcp.pop %v198
    %v202 = vmul.f32 %v198, %v201
    %v203 = vsub.f32 1.0, %v202
    %v204 = vmul.f32 %v201, %v203
    %v205 = vadd.f32 %v201, %v204
    %vm206 = vweird.f32 %v198
    %vm207 = vweird.f32 %v201
    %vm208 = vmor %vm206, %vm207
    %v209 = vsel %vm208, %v201, %v205
    %v210 = vand.u32 2147483647, %v198
    %vm211 = vcmp.eq.f32.partialorder %v210, 8.507059e+37
    %v212 = vand.u32 %v198, 2147483648
    %v213 = vor.u32 1.1754944e-38, %v212
    %v214 = vsel %vm211, %v213, %v209
    %v215 = vmul.f32 %v194, %v214
    %v216 = vrcp.pop %v200
    %v217 = vmul.f32 %v200, %v216
    %v218 = vsub.f32 1.0, %v217
    %v219 = vmul.f32 %v216, %v218
    %v220 = vadd.f32 %v216, %v219
    %vm221 = vweird.f32 %v200
    %vm222 = vweird.f32 %v216
    %vm223 = vmor %vm221, %vm222
    %v224 = vsel %vm223, %v216, %v220
    %v225 = vand.u32 2147483647, %v200
    %vm226 = vcmp.eq.f32.partialorder %v225, 8.507059e+37
    %v227 = vand.u32 %v200, 2147483648
    %v228 = vor.u32 1.1754944e-38, %v227
    %v229 = vsel %vm226, %v228, %v224
    %v230 = vmul.f32 %v196, %v229
    %v231 = vpack.c.bf16 %v215, %v215
    %v232 = vpack.c.bf16 %v230, %v230
    %v235 = vrot.slane %v231, 2
    %v236 = vrot.slane %v232, 2
    %vm237 = vcmask 1041408
    %v240 = vsel %vm237, %v231, %v235
    %vm241 = vcmask 1043458
    %v242 = vsel %vm241, %v231, %v235
    %v244 = vrot.slane %v242, 2
    %v247 = vsel %vm237, %v232, %v236
    %v248 = vsel %vm241, %v232, %v236
    %v250 = vrot.slane %v248, 2
    %255 = vst [vmem:[#allocation8] sm:$0x3] %v240
    %256 = vst [vmem:[#allocation8 + $0x2] sm:$0x3] %v244
    %257 = vst [vmem:[#allocation8 + $0x4] sm:$0x3] %v247
    %258 = vst [vmem:[#allocation8 + $0x6] sm:$0x3] %v250
    // Predicated region
    $region34: #{tpu_custom_call.1} parent=1 // pred_check
      _
    $region35: #{tpu_custom_call.1} parent=1 // pred_check_branch
      %260 = sbr.rel (0) target = $region37
    $region36: #{tpu_custom_call.1} parent=1 // pred_region
      %262 = vsyncadd [#allocation4], 96
      %s263 = sshll.u32 [#allocation8], 4
      %s264 = int_to_ptr.vmem [resolvable:$true] %s263
      %s265 = sshll.u32 %s5, 4
      %s266 = int_to_ptr.hbm [resolvable:$true] %s265
      %271 = dma.vmem_to_hbm [thread:$0]  %s264, 32, %s266, [#allocation4], 32, 32, 2
    $region37: #{tpu_custom_call.1} parent=1 // pred_fallthru
      _
    // Predicated region
    $region38: #{tpu_custom_call.1} parent=1 // pred_check
      _
    $region39: #{tpu_custom_call.1} parent=1 // pred_check_branch
      %273 = sbr.rel (0) target = $region41
    $region40: #{tpu_custom_call.1} parent=1 // pred_region
      %275 = dma.done [#allocation4], 128
    $region41: #{tpu_custom_call.1} parent=1 // pred_fallthru
      _
    %276 = vsyncpa [#allocation3], 1
    %277 = vsyncpa [#allocation6], 1
    %278 = vsyncpa [#allocation4], 1

</llo_original>
